<compile_context>
chip_gen: v7x
topology: tpu7x:2x2x1
jax: 0.10.0
libtpu: 0.0.40
codegen_flags: <defaults>
</compile_context>

<pallas_src>
import jax
import jax.numpy as jnp
from jax.experimental import pallas as pl
from jax.experimental.pallas import tpu as pltpu


def _elementwise_kernel(x_ref, o_ref):
    x = x_ref[...]
    # ((x + 1) - 2) * 3 / 4 — keep the PyTorch op order exactly.
    # ('/ 4.0' written as '* 0.25': bit-identical for a power-of-two scale.)
    y = (((x + 1.0) - 2.0) * 3.0) * 0.25
    o_ref[...] = y.astype(o_ref.dtype)


_LANE = 128
_TARGET_BLOCK_BYTES = 8 * 1024 * 1024      # ~8 MiB per input block
_VMEM_LIMIT_BYTES = 40 << 20               # fits v7x's 64 MiB physical VMEM


def _pick_lanes(n):
    """Widest lane count (multiple of 128) that exactly divides n."""
    for lanes in (4096, 2048, 1024, 512, 256, 128):
        if n % lanes == 0:
            return lanes
    return None


def _plain_forward(x):
    # Fused single-pass XLA fallback (also handles integer true-division
    # promotion exactly like PyTorch's `/ 4`).
    x = x + 1
    x = x - 2
    x = x * 3
    x = x / 4
    return x


@jax.jit
def pt_module_forward(x):
    """Apply ((x+1)-2)*3/4 elementwise via a Pallas TPU kernel."""
    orig_shape = x.shape
    dtype = x.dtype
    n = x.size

    # Non-float dtypes (PyTorch `/4` promotes to float) and empty arrays:
    # plain fused JAX is both correct and optimal (single HBM pass).
    if n == 0 or not jnp.issubdtype(dtype, jnp.floating):
        return _plain_forward(x)

    lanes = _pick_lanes(n)
    if lanes is None:
        # Ragged size (not a multiple of 128): pad+slice would triple HBM
        # traffic, so just let XLA fuse the elementwise chain in one pass.
        return _plain_forward(x)

    itemsize = jnp.dtype(dtype).itemsize
    # dtype-aware sublane packing: 8 rows (4B), 16 rows (2B), 32 rows (1B)
    pack = 8 * max(1, 4 // itemsize)

    rows = n // lanes
    x2d = x.reshape(rows, lanes)
    bytes_per_row = lanes * itemsize

    # Large lane-dense blocks (~8 MiB), sublane-pack aligned.
    tile_rows = _TARGET_BLOCK_BYTES // bytes_per_row
    tile_rows = max(pack, (tile_rows // pack) * pack)
    tile_rows = min(tile_rows, rows)

    # Megacore friendliness (v7x has 2 TCs): guarantee >= 2 grid steps and
    # avoid tiny odd grids, when the array is big enough to split.
    if rows >= 2 * pack:
        num_blocks = -(-rows // tile_rows)
        if num_blocks == 1:
            num_blocks = 2
        elif num_blocks % 2 == 1 and num_blocks <= 7:
            num_blocks += 1
        balanced = -(-rows // num_blocks)
        balanced = max(pack, ((balanced + pack - 1) // pack) * pack)
        tile_rows = min(tile_rows, balanced)

    grid = (pl.cdiv(rows, tile_rows),)  # Pallas masks the ragged last block

    out2d = pl.pallas_call(
        _elementwise_kernel,
        out_shape=jax.ShapeDtypeStruct((rows, lanes), dtype),
        grid=grid,
        in_specs=[pl.BlockSpec((tile_rows, lanes), lambda i: (i, 0))],
        out_specs=pl.BlockSpec((tile_rows, lanes), lambda i: (i, 0)),
        input_output_aliases={0: 0},  # output reuses the input HBM buffer
        cost_estimate=pl.CostEstimate(
            flops=4 * n,
            transcendentals=0,
            bytes_accessed=2 * n * itemsize,
        ),
        compiler_params=pltpu.CompilerParams(
            dimension_semantics=("parallel",),
            vmem_limit_bytes=_VMEM_LIMIT_BYTES,
        ),
    )(x2d)

    return out2d.reshape(orig_shape)


if __name__ == "__main__":
    key = jax.random.PRNGKey(0)
    # Small NCHW input consistent with the module: batch=2, ch=4, 16x16
    x = jax.random.normal(key, (2, 4, 16, 16), dtype=jnp.float32)

    out = jax.block_until_ready(pt_module_forward(x))

    # Reference check in plain JAX (same semantics as the PyTorch forward)
    ref = (((x + 1.0) - 2.0) * 3.0) / 4.0
    assert out.shape == x.shape and out.dtype == x.dtype
    assert jnp.allclose(out, ref, atol=1e-6, rtol=1e-6)

    print("KERNEL_OK")
</pallas_src>

<mosaic_0001>
module attributes {stable_mosaic.version = 11 : i64} {
  func.func @_elementwise_kernel(%arg0: i32, %arg1: memref<1x2048xf32, #tpu.memory_space<vmem>>, %arg2: memref<1x2048xf32, #tpu.memory_space<vmem>>) attributes {dimension_semantics = [#tpu.dimension_semantics<parallel>], iteration_bounds = array<i64: 1>, scalar_prefetch = 0 : i64, scratch_operands = 0 : i64, tpu.core_type = #tpu.core_type<tc>, window_params = [{transform_indices = @transform_0, window_bounds = array<i64: 1, 2048>}, {transform_indices = @transform_1, window_bounds = array<i64: 1, 2048>}]} {
    %c0 = arith.constant 0 : index
    %c0_0 = arith.constant 0 : index
    %0 = vector.load %arg1[%c0, %c0_0] : memref<1x2048xf32, #tpu.memory_space<vmem>>, vector<1x2048xf32>
    %cst = arith.constant 1.000000e+00 : f32
    %1 = vector.broadcast %cst : f32 to vector<1x2048xf32>
    %2 = arith.addf %0, %1 : vector<1x2048xf32>
    %cst_1 = arith.constant 2.000000e+00 : f32
    %3 = vector.broadcast %cst_1 : f32 to vector<1x2048xf32>
    %4 = arith.subf %2, %3 : vector<1x2048xf32>
    %cst_2 = arith.constant 3.000000e+00 : f32
    %5 = vector.broadcast %cst_2 : f32 to vector<1x2048xf32>
    %6 = arith.mulf %4, %5 : vector<1x2048xf32>
    %cst_3 = arith.constant 2.500000e-01 : f32
    %7 = vector.broadcast %cst_3 : f32 to vector<1x2048xf32>
    %8 = arith.mulf %6, %7 : vector<1x2048xf32>
    %c0_4 = arith.constant 0 : index
    %c0_5 = arith.constant 0 : index
    %9 = vector.load %arg2[%c0_4, %c0_5] : memref<1x2048xf32, #tpu.memory_space<vmem>>, vector<1x2048xf32>
    tpu.vector_store %arg2[%c0_4, %c0_5], %8 {strides = array<i32>} : memref<1x2048xf32, #tpu.memory_space<vmem>>, vector<1x2048xf32>,
    return
  }
  func.func @transform_0(%arg0: i32) -> (i32, i32) {
    %c0_i32 = arith.constant 0 : i32
    %c0_i32_0 = arith.constant 0 : i32
    return %arg0, %c0_i32 : i32, i32
  }
  func.func @transform_1(%arg0: i32) -> (i32, i32) {
    %c0_i32 = arith.constant 0 : i32
    %c0_i32_0 = arith.constant 0 : i32
    return %arg0, %c0_i32 : i32, i32
  }
}

</mosaic_0001>

<llo_original>
// kernel: pt_module_forward.1
$region0: #{pt_module_forward.1}
  #allocation0 [shape = 'u32[]', space=smem, size = 0x4, offset = 0x4, fixed_abs, tag = 'smem constant byte address 0x4 - core index']
  #allocation1 [shape = 'u32[144,128]{1,0:T(1,128)}', space=vmem, size = 0x12000, scoped, tag = 'internal scratch']
  %s0 = inlined_call_operand.vmem [shape: f32[1,2048], index: 0, kind: input, shape index: {}, may-alias: {0,1}]
  %s1 = inlined_call_operand.vmem [shape: f32[1,2048], index: 1, kind: output, shape index: {}, may-alias: {0,1}]
  %s2 = sld [smem:[#allocation0]]
  $region14: #{pt_module_forward.1} parent=0
    _
  %s4 = ssub.s32 1, %s2
  %s5 = scalar_select 0, %s4, %s2
  // Predicated region
  $region2: #{pt_module_forward.1} parent=0 // pred_check
    _
  $region3: #{pt_module_forward.1} parent=0 // pred_check_branch
    %7 = sbr.rel (0) target = $region5
  $region4: #{pt_module_forward.1} parent=0 // pred_region
    _
  $region5: #{pt_module_forward.1} parent=0 // pred_fallthru
    _
  %v8 = vld [vmem:[%s0] sm:$0xff]
  %v9 = vld [vmem:[%s0 + $0x8] sm:$0xff]
  %v10 = vadd.f32 %v8, 1.0
  %v11 = vadd.f32 %v9, 1.0
  %v12 = vsub.f32 %v10, 2.0
  %v13 = vsub.f32 %v11, 2.0
  %v14 = vmul.f32 %v12, 3.0
  %v15 = vmul.f32 %v13, 3.0
  %v16 = vmul.f32 %v14, 0.25
  %v17 = vmul.f32 %v15, 0.25
  %18 = vst [vmem:[%s1] sm:$0xff] %v16
  %19 = vst [vmem:[%s1 + $0x8] sm:$0xff] %v17
  // Predicated region
  $region6: #{pt_module_forward.1} parent=0 // pred_check
    _
  $region7: #{pt_module_forward.1} parent=0 // pred_check_branch
    %21 = sbr.rel (0) target = $region9
  $region8: #{pt_module_forward.1} parent=0 // pred_region
    _
  $region9: #{pt_module_forward.1} parent=0 // pred_fallthru
    _
  // Predicated region
  $region10: #{pt_module_forward.1} parent=0 // pred_check
    _
  $region11: #{pt_module_forward.1} parent=0 // pred_check_branch
    %23 = sbr.rel (0) target = $region13
  $region12: #{pt_module_forward.1} parent=0 // pred_region
    _
  $region13: #{pt_module_forward.1} parent=0 // pred_fallthru
    _

</llo_original>
